<compile_context>
chip_gen: v7x
topology: tpu7x:2x2x1
jax: 0.10.0
libtpu: 0.0.40
codegen_flags: <defaults>
</compile_context>

<pallas_src>
import functools
import math

import jax
import jax.numpy as jnp
from jax import lax
from jax.experimental import pallas as pl
from jax.experimental.pallas import tpu as pltpu


def _round_up(x, m):
    return ((x + m - 1) // m) * m


def _cdiv(a, b):
    return (a + b - 1) // b


def patch_embed_kernel(x_ref, w_ref, b_ref, o_ref):
    # x_ref: (tile_rows, K) | w_ref: (K, E) | b_ref: (1, E) f32
    acc = jnp.dot(x_ref[...], w_ref[...], preferred_element_type=jnp.float32)
    o_ref[...] = (acc + b_ref[...]).astype(o_ref.dtype)


def _resident_spec(shape):
    """BlockSpec for operands whose block index is constant across the grid.

    Single-buffer them when the installed jax supports per-BlockSpec buffer
    counts; otherwise fall back to the default double-buffering (harmless,
    ~1-2 MiB extra for ViT-B sized weights).
    """
    idx = lambda i: (0, 0)
    try:
        return pl.BlockSpec(shape, idx, pipeline_mode=pl.Buffered(1))
    except (TypeError, AttributeError):
        return pl.BlockSpec(shape, idx)


def patch_embed_pallas(x, weight, bias, *, patch_size, tile_rows=2048,
                       compute_dtype=jnp.bfloat16, out_dtype=None):
    """ViT PatchEmbed forward.

    x:      (B, C, H, W)
    weight: (E, C, p, p)   (PyTorch Conv2d layout)
    bias:   (E,)
    returns (B, N, E) with N = (H // p) * (W // p); dtype = out_dtype
            (defaults to compute_dtype, i.e. bf16).
    """
    B, C, H, W = x.shape
    p = patch_size
    E = weight.shape[0]
    gh, gw = H // p, W // p
    N = gh * gw
    K = C * p * p
    rows = B * N

    if out_dtype is None:
        out_dtype = compute_dtype

    # ---- patchify in the wrapper (pure layout plumbing; presents a lane-dense
    # (rows, K) slab). Strided conv-window extraction is not expressible as an
    # (8,128)-legal BlockSpec, so it stays in XLA; allow_input_fusion below
    # lets XLA fuse this producer into the kernel operand when possible. ----
    xp = x.reshape(B, C, gh, p, gw, p)
    xp = jnp.transpose(xp, (0, 2, 4, 1, 3, 5))            # (B, gh, gw, C, p, p)
    patches = xp.reshape(rows, K).astype(compute_dtype)

    # Conv2d weight (E, C, p, p) -> (K, E); bias stays f32, added to f32 acc.
    w2 = jnp.transpose(weight.reshape(E, K), (1, 0)).astype(compute_dtype)
    b2 = bias.reshape(1, E).astype(jnp.float32)

    # ---- tile choice ---------------------------------------------------------
    sub = 16 if compute_dtype == jnp.bfloat16 else 8
    if rows >= 2 * 256:
        # Large inputs: multiple-of-256 tiles (fills MXU M on every gen), and
        # aim for >= ~4 grid steps so the parallel axis shards across both
        # TensorCores on v7x and pipelining has something to overlap.
        tile_rows = min(tile_rows, _round_up(_cdiv(rows, 4), 256))
        tile_rows = max(256, _round_up(tile_rows, 256))
    elif rows >= 256:
        tile_rows = 128          # >=2 steps, M stays 128-aligned (v5e MXU)
    else:
        tile_rows = _round_up(min(tile_rows, max(rows, sub)), sub)

    # ---- generation-aware VMEM budget ---------------------------------------
    cbytes = jnp.dtype(compute_dtype).itemsize
    obytes = jnp.dtype(out_dtype).itemsize

    def vmem_needed(tr):
        # Conservatively count 2 copies of the constant weight/bias blocks.
        return (2 * K * E * cbytes + 2 * E * 4
                + 2 * tr * K * cbytes + 2 * tr * E * obytes)

    try:
        phys = int(pltpu.get_tpu_info().vmem_capacity_bytes)
        vmem_cap = (phys * 3) // 4            # ~48 MiB v7x, ~96 MiB v5e/v6e
    except Exception:
        vmem_cap = 48 * 1024 * 1024           # safe on every generation

    while tile_rows > 256 and vmem_needed(tile_rows) > (vmem_cap * 3) // 4:
        tile_rows = max(256, _round_up(tile_rows // 2, 256))

    grid = (pl.cdiv(rows, tile_rows),)
    vmem_limit = int(min(vmem_cap,
                         max(32 * 1024 * 1024,
                             int(vmem_needed(tile_rows) * 1.5))))

    out = pl.pallas_call(
        patch_embed_kernel,
        out_shape=jax.ShapeDtypeStruct((rows, E), out_dtype),
        grid_spec=pltpu.PrefetchScalarGridSpec(
            num_scalar_prefetch=0,
            grid=grid,
            in_specs=[
                pl.BlockSpec((tile_rows, K), lambda i: (i, 0)),   # patch rows
                _resident_spec((K, E)),                           # proj weight
                _resident_spec((1, E)),                           # bias (f32)
            ],
            out_specs=pl.BlockSpec((tile_rows, E), lambda i: (i, 0)),
        ),
        compiler_params=pltpu.CompilerParams(
            dimension_semantics=("parallel",),
            vmem_limit_bytes=vmem_limit,
            # Only the activation slab benefits from producer fusion; weights
            # and bias are tiny and reused across the whole grid.
            allow_input_fusion=[True, False, False],
        ),
    )(patches, w2, b2)

    return out.reshape(B, N, E)


def patch_embed_reference(x, weight, bias, patch_size):
    y = lax.conv_general_dilated(
        x, weight, window_strides=(patch_size, patch_size), padding="VALID",
        dimension_numbers=("NCHW", "OIHW", "NCHW"))
    B, E, gh, gw = y.shape
    y = y + bias.reshape(1, E, 1, 1)
    return jnp.transpose(y.reshape(B, E, gh * gw), (0, 2, 1))


if __name__ == "__main__":
    # Small PatchEmbed: batch=2, channels=4, 16x16 image, patch=4 -> 16 tokens,
    # embed_dim=128 (multiple of 128 so output stores are lane-dense).
    B, C, H, W = 2, 4, 16, 16
    p = 4
    E = 128

    key = jax.random.PRNGKey(0)
    kx, kw, kb = jax.random.split(key, 3)

    x = jax.random.normal(kx, (B, C, H, W), dtype=jnp.float32)

    # Deterministic Conv2d-style init (uniform within +/- 1/sqrt(fan_in)).
    fan_in = C * p * p
    bound = 1.0 / math.sqrt(fan_in)
    weight = jax.random.uniform(kw, (E, C, p, p), jnp.float32, -bound, bound)
    bias = jax.random.uniform(kb, (E,), jnp.float32, -bound, bound)

    # jit so the XLA patchify producer and the pallas_call sit in one
    # computation (required for allow_input_fusion to do anything).
    fn = jax.jit(functools.partial(patch_embed_pallas, patch_size=p))
    y = jax.block_until_ready(fn(x, weight, bias))

    y_ref = patch_embed_reference(x, weight, bias, p)
    N = (H // p) * (W // p)
    assert y.shape == (B, N, E), y.shape
    assert y.dtype == jnp.bfloat16, y.dtype
    # bf16 operands + bf16 output vs full-f32 XLA conv reference.
    max_err = float(jnp.max(jnp.abs(y.astype(jnp.float32) - y_ref)))
    assert max_err < 3e-2, max_err

    print("KERNEL_OK")
</pallas_src>

<mosaic_0001>
module attributes {stable_mosaic.version = 11 : i64} {
  func.func @patch_embed_kernel(%arg0: i32, %arg1: memref<32x64xbf16, #tpu.memory_space<vmem>>, %arg2: memref<64x128xbf16, #tpu.memory_space<vmem>>, %arg3: memref<1x128xf32, #tpu.memory_space<vmem>>, %arg4: memref<32x128xbf16, #tpu.memory_space<vmem>>) attributes {dimension_semantics = [#tpu.dimension_semantics<parallel>], iteration_bounds = array<i64: 1>, scalar_prefetch = 0 : i64, scratch_operands = 0 : i64, tpu.core_type = #tpu.core_type<tc>, window_params = [{transform_indices = @transform_0, window_bounds = array<i64: 32, 64>}, {pipeline_mode = #tpu.pipeline_mode<synchronous>, transform_indices = @transform_1, window_bounds = array<i64: 64, 128>}, {pipeline_mode = #tpu.pipeline_mode<synchronous>, transform_indices = @transform_2, window_bounds = array<i64: 1, 128>}, {transform_indices = @transform_3, window_bounds = array<i64: 32, 128>}]} {
    %c0 = arith.constant 0 : index
    %c0_0 = arith.constant 0 : index
    %0 = vector.load %arg1[%c0, %c0_0] : memref<32x64xbf16, #tpu.memory_space<vmem>>, vector<32x64xbf16>
    %c0_1 = arith.constant 0 : index
    %c0_2 = arith.constant 0 : index
    %1 = vector.load %arg2[%c0_1, %c0_2] : memref<64x128xbf16, #tpu.memory_space<vmem>>, vector<64x128xbf16>
    %cst = arith.constant dense<0.000000e+00> : vector<32x128xf32>
    %2 = tpu.matmul %0, %1, %cst {dimension_numbers = #tpu.dot_dimension_numbers<[1], [0], [0], [1], [0, 0, 1, 1], [], []>} : vector<32x64xbf16>, vector<64x128xbf16>, vector<32x128xf32> -> vector<32x128xf32>
    %c0_3 = arith.constant 0 : index
    %c0_4 = arith.constant 0 : index
    %3 = vector.load %arg3[%c0_3, %c0_4] : memref<1x128xf32, #tpu.memory_space<vmem>>, vector<1x128xf32>
    %4 = vector.broadcast %3 : vector<1x128xf32> to vector<32x128xf32>
    %5 = arith.addf %2, %4 : vector<32x128xf32>
    %6 = arith.truncf %5 : vector<32x128xf32> to vector<32x128xbf16>
    %c0_5 = arith.constant 0 : index
    %c0_6 = arith.constant 0 : index
    %7 = vector.load %arg4[%c0_5, %c0_6] : memref<32x128xbf16, #tpu.memory_space<vmem>>, vector<32x128xbf16>
    tpu.vector_store %arg4[%c0_5, %c0_6], %6 {strides = array<i32>} : memref<32x128xbf16, #tpu.memory_space<vmem>>, vector<32x128xbf16>,
    return
  }
  func.func @transform_0(%arg0: i32) -> (i32, i32) {
    %c0_i32 = arith.constant 0 : i32
    %c0_i32_0 = arith.constant 0 : i32
    return %arg0, %c0_i32 : i32, i32
  }
  func.func @transform_1(%arg0: i32) -> (i32, i32) {
    %c0_i32 = arith.constant 0 : i32
    %c0_i32_0 = arith.constant 0 : i32
    %c0_i32_1 = arith.constant 0 : i32
    return %c0_i32, %c0_i32_0 : i32, i32
  }
  func.func @transform_2(%arg0: i32) -> (i32, i32) {
    %c0_i32 = arith.constant 0 : i32
    %c0_i32_0 = arith.constant 0 : i32
    %c0_i32_1 = arith.constant 0 : i32
    return %c0_i32, %c0_i32_0 : i32, i32
  }
  func.func @transform_3(%arg0: i32) -> (i32, i32) {
    %c0_i32 = arith.constant 0 : i32
    %c0_i32_0 = arith.constant 0 : i32
    return %arg0, %c0_i32 : i32, i32
  }
}

</mosaic_0001>

<llo_original>
// kernel: patch_embed_pallas.1
$region0: #{patch_embed_pallas.1}
  #allocation0 [shape = 'u32[]', space=smem, size = 0x4, offset = 0x4, fixed_abs, tag = 'smem constant byte address 0x4 - core index']
  #allocation1 [shape = 'u32[144,128]{1,0:T(1,128)}', space=vmem, size = 0x12000, scoped, tag = 'internal scratch']
  %s0 = inlined_call_operand.vmem [shape: bf16[32,64], index: 0, kind: input, shape index: {}]
  %s1 = inlined_call_operand.vmem [shape: bf16[64,128], index: 1, kind: input, shape index: {}]
  %s2 = inlined_call_operand.vmem [shape: f32[1,128], index: 2, kind: input, shape index: {}]
  %s3 = inlined_call_operand.hbm [shape: bf16[32,128], index: 3, kind: output, shape index: {}]
  %s4 = sld [smem:[#allocation0]]
  $region22: #{patch_embed_pallas.1} parent=0
    _
  %s6 = ssub.s32 1, %s4
  %s7 = scalar_select 0, %s6, %s4
  $region1: #{patch_embed_pallas.1} parent=0
    #allocation2 [shape = 'u8[8192]{0}', space=vmem, size = 0x2000, scoped, tag = 'output window, operand 0, single buffered']
    #allocation3 [shape = 's32[1]{0}', space=sflag, size = 0x4, scoped, tag = 'scoped memory for patch_embed_pallas.1']
    %8 = vsyncpa [#allocation3], 0
    // Predicated region
    $region2: #{patch_embed_pallas.1} parent=1 // pred_check
      _
    $region3: #{patch_embed_pallas.1} parent=1 // pred_check_branch
      %10 = sbr.rel (0) target = $region5
    $region4: #{patch_embed_pallas.1} parent=1 // pred_region
      _
    $region5: #{patch_embed_pallas.1} parent=1 // pred_fallthru
      _
    // Predicated region
    $region6: #{patch_embed_pallas.1} parent=1 // pred_check
      _
    $region7: #{patch_embed_pallas.1} parent=1 // pred_check_branch
      %12 = sbr.rel (0) target = $region9
    $region8: #{patch_embed_pallas.1} parent=1 // pred_region
      _
    $region9: #{patch_embed_pallas.1} parent=1 // pred_fallthru
      _
    // Predicated region
    $region10: #{patch_embed_pallas.1} parent=1 // pred_check
      _
    $region11: #{patch_embed_pallas.1} parent=1 // pred_check_branch
      %14 = sbr.rel (0) target = $region13
    $region12: #{patch_embed_pallas.1} parent=1 // pred_region
      _
    $region13: #{patch_embed_pallas.1} parent=1 // pred_fallthru
      _
    %v16 = vld [vmem:[%s0] sm:$0xf]
    %v17 = vld [vmem:[%s0 + $0x4] sm:$0xf]
    %v18 = vld [vmem:[%s0 + $0x8] sm:$0xf]
    %v19 = vld [vmem:[%s0 + $0xc] sm:$0xf]
    %v20 = vld [vmem:[%s1] sm:$0xf]
    %v21 = vld [vmem:[%s1 + $0x4] sm:$0xf]
    %v22 = vld [vmem:[%s1 + $0x8] sm:$0xf]
    %v23 = vld [vmem:[%s1 + $0xc] sm:$0xf]
    %v24 = vld [vmem:[%s1 + $0x10] sm:$0xf]
    %v25 = vld [vmem:[%s1 + $0x14] sm:$0xf]
    %v26 = vld [vmem:[%s1 + $0x18] sm:$0xf]
    %v27 = vld [vmem:[%s1 + $0x1c] sm:$0xf]
    %v28 = vld [vmem:[%s2] sm:$0x1]
    %v30 = vlaneseq
    %v31 = vshrl.u32 %v30, 7
    %v32 = vsub.s32 0, %v31
    %v33 = vrot.slane %v28, %v32
    %v39 = vunpack.c.l.b16 %v16
    %v40 = vunpack.c.l.b16 %v17
    %v41 = vunpack.c.l.b16 %v18
    %v42 = vunpack.c.l.b16 %v19
    %v43 = vpack.c.b16 %v40, %v39
    %v44 = vpack.c.b16 %v42, %v41
    %v53 = vunpack.c.l.b16 %v20
    %v54 = vunpack.c.l.b16 %v21
    %v55 = vunpack.c.l.b16 %v22
    %v56 = vunpack.c.l.b16 %v23
    %v57 = vunpack.c.l.b16 %v24
    %v58 = vunpack.c.l.b16 %v25
    %v59 = vunpack.c.l.b16 %v26
    %v60 = vunpack.c.l.b16 %v27
    %v61 = vpack.c.b16 %v54, %v53
    %v62 = vpack.c.b16 %v56, %v55
    %v63 = vpack.c.b16 %v58, %v57
    %v64 = vpack.c.b16 %v60, %v59
    %vm69 = vcmask 523264
    %v71 = vsel %vm69, %v43, 0
    %v74 = vsel %vm69, %v44, 0
    %76 = vmatprep.subr.bf16.mxu0 0
    %77 = vmatpush1.bf16.msra.mxu0 %v61
    %78 = vmatprep.subr.bf16.mxu0 0
    %79 = vmatpush1.bf16.msra.mxu0 %v62
    %80 = vmatprep.subr.bf16.mxu0 0
    %81 = vmatpush1.bf16.msra.mxu0 %v63
    %82 = vmatprep.subr.bf16.mxu0 0
    %83 = vmatpush1.bf16.msra.mxu0 %v64
    %84 = vmatprep.subr.bf16.mxu0 0
    %85 = vmatpush1.bf16.msra.mxu0 0
    %86 = vmatprep.subr.bf16.mxu0 0
    %87 = vmatpush1.bf16.msra.mxu0 0
    %88 = vmatprep.subr.bf16.mxu0 0
    %89 = vmatpush1.bf16.msra.mxu0 0
    %90 = vmatprep.subr.bf16.mxu0 0
    %91 = vmatpush1.bf16.msra.mxu0 0
    %92 = vmatprep.subr.bf16.mxu0 0
    %93 = vmatpush1.bf16.msra.mxu0 0
    %94 = vmatprep.subr.bf16.mxu0 0
    %95 = vmatpush1.bf16.msra.mxu0 0
    %96 = vmatprep.subr.bf16.mxu0 0
    %97 = vmatpush1.bf16.msra.mxu0 0
    %98 = vmatprep.subr.bf16.mxu0 0
    %99 = vmatpush1.bf16.msra.mxu0 0
    %100 = vmatprep.subr.bf16.mxu0 0
    %101 = vmatpush1.bf16.msra.mxu0 0
    %102 = vmatprep.subr.bf16.mxu0 0
    %103 = vmatpush1.bf16.msra.mxu0 0
    %104 = vmatprep.subr.bf16.mxu0 0
    %105 = vmatpush1.bf16.msra.mxu0 0
    %106 = vmatprep.subr.bf16.mxu0 0
    %107 = vmatpush1.bf16.msra.mxu0 0
    %108 = vmatprep.mubr.bf16.mxu0 0
    %109 = vmatmul.mubr.bf16.gmra.mrb[0].mxu0 %v71
    %v110 = vpop.f32.mrb[0].mxu0
    %v111 = vadd.f32 %v33, %v110
    %v112 = vpop.f32.mrb[0].mxu0
    %v113 = vpop.f32.mrb[0].mxu0
    %v114 = vadd.f32 %v33, %v113
    %v115 = vpop.f32.mrb[0].mxu0
    %116 = vmatprep.mubr.bf16.mxu0 0
    %117 = vmatmul.mubr.bf16.gmra.mrb[0].mxu0 %v74
    %v118 = vpop.f32.mrb[0].mxu0
    %v119 = vadd.f32 %v33, %v118
    %v120 = vpop.f32.mrb[0].mxu0
    %v121 = vpop.f32.mrb[0].mxu0
    %v122 = vadd.f32 %v33, %v121
    %v123 = vpop.f32.mrb[0].mxu0
    %124 = vdwg.mxu0
    %v125 = vpack.c.bf16 %v114, %v111
    %v126 = vpack.c.bf16 %v122, %v119
    %v129 = vunpack.c.l.b16 %v125
    %v130 = vunpack.c.h.b16 %v125
    %v131 = vunpack.c.l.b16 %v126
    %v132 = vunpack.c.h.b16 %v126
    %v133 = vpack.c.b16 %v129, %v129
    %v134 = vpack.c.b16 %v130, %v130
    %v135 = vpack.c.b16 %v131, %v131
    %v136 = vpack.c.b16 %v132, %v132
    %141 = vst [vmem:[#allocation2] sm:$0xf] %v133
    %142 = vst [vmem:[#allocation2 + $0x4] sm:$0xf] %v134
    %143 = vst [vmem:[#allocation2 + $0x8] sm:$0xf] %v135
    %144 = vst [vmem:[#allocation2 + $0xc] sm:$0xf] %v136
    // Predicated region
    $region14: #{patch_embed_pallas.1} parent=1 // pred_check
      _
    $region15: #{patch_embed_pallas.1} parent=1 // pred_check_branch
      %146 = sbr.rel (0) target = $region17
    $region16: #{patch_embed_pallas.1} parent=1 // pred_region
      %s148 = ssub.s32 256, 256
      %149 = vsyncadd [#allocation3], %s148
      %s150 = sshll.u32 [#allocation2], 4
      %s151 = int_to_ptr.vmem [resolvable:$true] %s150
      %156 = dma.vmem_to_hbm [thread:$0]  %s151, 256, %s3, [#allocation3], 64, 64, 4
    $region17: #{patch_embed_pallas.1} parent=1 // pred_fallthru
      _
    // Predicated region
    $region18: #{patch_embed_pallas.1} parent=1 // pred_check
      _
    $region19: #{patch_embed_pallas.1} parent=1 // pred_check_branch
      %158 = sbr.rel (0) target = $region21
    $region20: #{patch_embed_pallas.1} parent=1 // pred_region
      %159 = dma.done [#allocation3], 256
    $region21: #{patch_embed_pallas.1} parent=1 // pred_fallthru
      _
    %160 = vsyncpa [#allocation3], 1

</llo_original>
